<compile_context>
chip_gen: v7x
topology: tpu7x:2x2x1
jax: 0.10.0
libtpu: 0.0.40
codegen_flags: <defaults>
</compile_context>

<pallas_src>
import functools

import jax
import jax.numpy as jnp
from jax.experimental import pallas as pl
from jax.experimental.pallas import tpu as pltpu


def _ce_rows_kernel(labels_ref, logits_ref, ce_ref):
    """Per-row cross entropy for one (tile_n, C) block of logits."""
    x = logits_ref[...].astype(jnp.float32)                  # (T, C)
    lbl = labels_ref[...]                                    # (T, 1) int32

    # Numerically-stable log-sum-exp per row.
    m = jnp.max(x, axis=-1, keepdims=True)                   # (T, 1)
    lse = jnp.log(jnp.sum(jnp.exp(x - m), axis=-1, keepdims=True)) + m

    # Gather the logit at the label index via a lane-index compare + select.
    cols = jax.lax.broadcasted_iota(jnp.int32, x.shape, 1)   # (T, C)
    picked = jnp.sum(jnp.where(cols == lbl, x, 0.0),
                     axis=-1, keepdims=True)                 # (T, 1)

    ce_ref[...] = lse - picked                               # per-row CE


def _round_up(x: int, m: int) -> int:
    return ((x + m - 1) // m) * m


def _pick_tile_n(n: int, c: int, itemsize: int) -> int:
    """Rows per block: ~2 MiB of logits, sublane-aligned, capped at 1024."""
    sublane = max(8, 32 // max(1, itemsize))      # 8 for f32, 16 for bf16
    target_bytes = 2 * 1024 * 1024
    t = target_bytes // max(1, c * itemsize)
    t = max(sublane, min(t, 1024))
    t = (t // sublane) * sublane
    t = min(t, _round_up(n, sublane))             # don't exceed (padded) batch
    return max(t, sublane)


def focal_loss(prediction, labels, *, gamma: float = 0.0, eps: float = 1e-7):
    """Focal loss over (N, C) logits and (N,) integer labels. Returns a scalar."""
    del eps  # unused in the reference forward pass
    N, C = prediction.shape
    itemsize = jnp.dtype(prediction.dtype).itemsize
    tile_n = _pick_tile_n(N, C, itemsize)

    # Pad the batch so the grid divides evenly (padded rows are sliced off
    # before the reduction, so their contents never affect the result).
    n_pad = _round_up(N, tile_n)
    if n_pad != N:
        prediction = jnp.pad(prediction, ((0, n_pad - N), (0, 0)))
        labels = jnp.pad(labels, (0, n_pad - N))
    labels2d = labels.reshape(n_pad, 1).astype(jnp.int32)

    grid = (n_pad // tile_n,)
    ce_rows = pl.pallas_call(
        _ce_rows_kernel,
        out_shape=jax.ShapeDtypeStruct((n_pad, 1), jnp.float32),
        grid_spec=pltpu.PrefetchScalarGridSpec(
            num_scalar_prefetch=0,
            grid=grid,
            in_specs=[
                pl.BlockSpec((tile_n, 1), lambda i: (i, 0)),   # labels
                pl.BlockSpec((tile_n, C), lambda i: (i, 0)),   # logits
            ],
            out_specs=pl.BlockSpec((tile_n, 1), lambda i: (i, 0)),
        ),
        compiler_params=pltpu.CompilerParams(
            dimension_semantics=("parallel",),        # no cross-step state
            vmem_limit_bytes=32 * 1024 * 1024,
        ),
    )(labels2d, prediction)

    # Mean CE over the true batch, then the focal reweighting of the scalar.
    logp = jnp.sum(ce_rows[:N, 0]) / jnp.float32(N)
    p = jnp.exp(-logp)
    return ((1.0 - p) ** gamma) * logp


def _focal_loss_ref(prediction, labels, gamma=0.0):
    # Pure-JAX reference mirroring torch.nn.CrossEntropyLoss + focal term.
    x = prediction.astype(jnp.float32)
    lse = jax.scipy.special.logsumexp(x, axis=-1)
    picked = jnp.take_along_axis(x, labels[:, None], axis=-1)[:, 0]
    logp = jnp.mean(lse - picked)
    p = jnp.exp(-logp)
    return ((1.0 - p) ** gamma) * logp


if __name__ == "__main__":
    key = jax.random.PRNGKey(0)
    k1, k2, k3, k4 = jax.random.split(key, 4)

    # Small demo shape: batch=8, num_classes=32.
    N, C = 8, 32
    gamma = 2.0                      # exercise the focal reweighting term
    prediction = jax.random.normal(k1, (N, C), dtype=jnp.float32)
    labels = jax.random.randint(k2, (N,), 0, C, dtype=jnp.int32)

    loss = jax.block_until_ready(focal_loss(prediction, labels, gamma=gamma))
    ref = _focal_loss_ref(prediction, labels, gamma=gamma)
    assert jnp.allclose(loss, ref, rtol=1e-5, atol=1e-5), (loss, ref)

    # Second check: batch not a multiple of the sublane tile (padding path).
    N2 = 20
    prediction2 = jax.random.normal(k3, (N2, C), dtype=jnp.float32)
    labels2 = jax.random.randint(k4, (N2,), 0, C, dtype=jnp.int32)
    loss2 = jax.block_until_ready(focal_loss(prediction2, labels2, gamma=gamma))
    ref2 = _focal_loss_ref(prediction2, labels2, gamma=gamma)
    assert jnp.allclose(loss2, ref2, rtol=1e-5, atol=1e-5), (loss2, ref2)

    print("KERNEL_OK")
</pallas_src>

<mosaic_0001>
module attributes {stable_mosaic.version = 11 : i64} {
  func.func @_ce_rows_kernel(%arg0: i32, %arg1: memref<8x1xi32, #tpu.memory_space<vmem>>, %arg2: memref<8x32xf32, #tpu.memory_space<vmem>>, %arg3: memref<8x1xf32, #tpu.memory_space<vmem>>) attributes {dimension_semantics = [#tpu.dimension_semantics<parallel>], iteration_bounds = array<i64: 1>, scalar_prefetch = 0 : i64, scratch_operands = 0 : i64, tpu.core_type = #tpu.core_type<tc>, window_params = [{transform_indices = @transform_0, window_bounds = array<i64: 8, 1>}, {transform_indices = @transform_1, window_bounds = array<i64: 8, 32>}, {transform_indices = @transform_2, window_bounds = array<i64: 8, 1>}]} {
    %c0 = arith.constant 0 : index
    %c0_0 = arith.constant 0 : index
    %0 = vector.load %arg2[%c0, %c0_0] : memref<8x32xf32, #tpu.memory_space<vmem>>, vector<8x32xf32>
    %c0_1 = arith.constant 0 : index
    %c0_2 = arith.constant 0 : index
    %1 = vector.load %arg1[%c0_1, %c0_2] : memref<8x1xi32, #tpu.memory_space<vmem>>, vector<8x1xi32>
    %cst = arith.constant dense<0xFF800000> : vector<8xf32>
    %2 = vector.multi_reduction <maximumf>, %0, %cst [1] : vector<8x32xf32> to vector<8xf32>
    %3 = vector.shape_cast %2 : vector<8xf32> to vector<8x1xf32>
    %4 = vector.broadcast %3 : vector<8x1xf32> to vector<8x32xf32>
    %5 = arith.subf %0, %4 : vector<8x32xf32>
    %6 = math.exp %5 : vector<8x32xf32>
    %cst_3 = arith.constant dense<0.000000e+00> : vector<8xf32>
    %7 = vector.multi_reduction <add>, %6, %cst_3 [1] : vector<8x32xf32> to vector<8xf32>
    %8 = vector.shape_cast %7 : vector<8xf32> to vector<8x1xf32>
    %9 = math.log %8 : vector<8x1xf32>
    %10 = arith.addf %9, %3 : vector<8x1xf32>
    %11 = tpu.iota {dimensions = array<i32: 1>} : vector<8x32xi32>
    %12 = vector.broadcast %1 : vector<8x1xi32> to vector<8x32xi32>
    %13 = arith.cmpi eq, %11, %12 : vector<8x32xi32>
    %cst_4 = arith.constant 0.000000e+00 : f32
    %14 = vector.broadcast %cst_4 : f32 to vector<8x32xf32>
    %15 = arith.select %13, %0, %14 : vector<8x32xi1>, vector<8x32xf32>
    %cst_5 = arith.constant dense<0.000000e+00> : vector<8xf32>
    %16 = vector.multi_reduction <add>, %15, %cst_5 [1] : vector<8x32xf32> to vector<8xf32>
    %17 = vector.shape_cast %16 : vector<8xf32> to vector<8x1xf32>
    %18 = arith.subf %10, %17 : vector<8x1xf32>
    %c0_6 = arith.constant 0 : index
    %c0_7 = arith.constant 0 : index
    %19 = vector.load %arg3[%c0_6, %c0_7] : memref<8x1xf32, #tpu.memory_space<vmem>>, vector<8x1xf32>
    tpu.vector_store %arg3[%c0_6, %c0_7], %18 {strides = array<i32>} : memref<8x1xf32, #tpu.memory_space<vmem>>, vector<8x1xf32>,
    return
  }
  func.func @transform_0(%arg0: i32) -> (i32, i32) {
    %c0_i32 = arith.constant 0 : i32
    %c0_i32_0 = arith.constant 0 : i32
    return %arg0, %c0_i32 : i32, i32
  }
  func.func @transform_1(%arg0: i32) -> (i32, i32) {
    %c0_i32 = arith.constant 0 : i32
    %c0_i32_0 = arith.constant 0 : i32
    return %arg0, %c0_i32 : i32, i32
  }
  func.func @transform_2(%arg0: i32) -> (i32, i32) {
    %c0_i32 = arith.constant 0 : i32
    %c0_i32_0 = arith.constant 0 : i32
    return %arg0, %c0_i32 : i32, i32
  }
}

</mosaic_0001>

<llo_original>
// kernel: tpu_custom_call.1
$region0: #{tpu_custom_call.1}
  #allocation0 [shape = 'u32[]', space=smem, size = 0x4, offset = 0x4, fixed_abs, tag = 'smem constant byte address 0x4 - core index']
  #allocation1 [shape = 'u32[144,128]{1,0:T(1,128)}', space=vmem, size = 0x12000, scoped, tag = 'internal scratch']
  %s0 = inlined_call_operand.vmem [shape: s32[8,1], index: 0, kind: input, shape index: {}]
  %s1 = inlined_call_operand.vmem [shape: f32[8,32], index: 1, kind: input, shape index: {}]
  %s2 = inlined_call_operand.vmem [shape: f32[8,1], index: 2, kind: output, shape index: {}]
  %s3 = sld [smem:[#allocation0]]
  $region18: #{tpu_custom_call.1} parent=0
    _
  %s5 = ssub.s32 1, %s3
  %s6 = scalar_select 0, %s5, %s3
  // Predicated region
  $region2: #{tpu_custom_call.1} parent=0 // pred_check
    _
  $region3: #{tpu_custom_call.1} parent=0 // pred_check_branch
    %8 = sbr.rel (0) target = $region5
  $region4: #{tpu_custom_call.1} parent=0 // pred_region
    _
  $region5: #{tpu_custom_call.1} parent=0 // pred_fallthru
    _
  // Predicated region
  $region6: #{tpu_custom_call.1} parent=0 // pred_check
    _
  $region7: #{tpu_custom_call.1} parent=0 // pred_check_branch
    %10 = sbr.rel (0) target = $region9
  $region8: #{tpu_custom_call.1} parent=0 // pred_region
    _
  $region9: #{tpu_custom_call.1} parent=0 // pred_fallthru
    _
  %v11 = vld [vmem:[%s1] sm:$0xff]
  %v12 = vld [vmem:[%s0] sm:$0xff]
  %vm13 = vcmask 261120
  %v14 = vsel %vm13, %v11, -inf
  %15 = vmax.xlane.f32.xlu0 %v14
  %v16 = vpop.xlane.xlu0 %15
  %v17 = vsub.f32 %v11, %v16
  %v18 = vmul.f32 %v17, 1.442695
  %v19 = vpow.pop %v18
  %v20 = vsel %vm13, %v19, 0.0
  %21 = vadd.xlane.f32.xlu0 %v20
  %v22 = vpop.xlane.xlu0 %21
  %v23 = vlog2.pop %v22
  %v24 = vmul.f32 %v23, 0.6931472
  %v25 = vadd.f32 %v24, %v16
  %v26 = vlaneseq
  %v27 = vand.u32 %v26, 127
  %28 = vset.pattern.permute.xlu0 0
  %29 = vperm.xlu0 %28, %v12
  %v30 = vpop.permute.xlu0 %29
  %vm31 = vcmp.eq.s32.totalorder %v27, %v30
  %v32 = vsel %vm31, %v11, 0.0
  %v33 = vsel %vm13, %v32, 0.0
  %34 = vadd.xlane.f32.xlu0 %v33
  %v35 = vpop.xlane.xlu0 %34
  %v36 = vsub.f32 %v25, %v35
  %vm37 = vcmask 7168
  %38 = vst.msk [vmem:[%s2] sm:$0xff] %vm37, %v36
  // Predicated region
  $region10: #{tpu_custom_call.1} parent=0 // pred_check
    _
  $region11: #{tpu_custom_call.1} parent=0 // pred_check_branch
    %40 = sbr.rel (0) target = $region13
  $region12: #{tpu_custom_call.1} parent=0 // pred_region
    _
  $region13: #{tpu_custom_call.1} parent=0 // pred_fallthru
    _
  // Predicated region
  $region14: #{tpu_custom_call.1} parent=0 // pred_check
    _
  $region15: #{tpu_custom_call.1} parent=0 // pred_check_branch
    %42 = sbr.rel (0) target = $region17
  $region16: #{tpu_custom_call.1} parent=0 // pred_region
    _
  $region17: #{tpu_custom_call.1} parent=0 // pred_fallthru
    _

</llo_original>
